<compile_context>
chip_gen: v7x
topology: tpu7x:2x2x1
jax: 0.10.0
libtpu: 0.0.40
codegen_flags: <defaults>
</compile_context>

<pallas_src>
import numpy as np
import jax
import jax.numpy as jnp
from jax.experimental import pallas as pl
from jax.experimental.pallas import tpu as pltpu


# ----------------------------------------------------------------------------
# Host-side deterministic parameter construction (numpy, no scipy needed).
# ----------------------------------------------------------------------------
def transition(N):
    Q = np.arange(N, dtype=np.float64)
    R = (2 * Q + 1)[:, None]
    j, i = np.meshgrid(Q, Q)
    A = np.where(i < j, -1, (-1.0) ** (i - j + 1)) * R
    B = (-1.0) ** Q[:, None] * R
    return A, B


def cont2discrete_bilinear(A, B, dt):
    # scipy.signal.cont2discrete(..., method='bilinear') for the (A, B) pair.
    N = A.shape[0]
    I = np.eye(N)
    M = I - (dt / 2.0) * A
    Ad = np.linalg.solve(M, I + (dt / 2.0) * A)
    Bd = np.linalg.solve(M, dt * B)
    return Ad, Bd


def eval_legendre_matrix(N, x):
    # P[t, n] = P_n(x[t])  (== scipy.special.eval_legendre(arange(N)[:,None], x).T)
    T = x.shape[0]
    P = np.zeros((T, N), dtype=np.float64)
    P[:, 0] = 1.0
    if N > 1:
        P[:, 1] = x
    for n in range(1, N - 1):
        P[:, n + 1] = ((2 * n + 1) * x * P[:, n] - n * P[:, n - 1]) / (n + 1)
    return P


# ----------------------------------------------------------------------------
# Fused kernel: RevIN normalize -> single folded matmul (+bias) -> denormalize.
# Grid = (ceil(M / tm),) over the batch*channel rows ("parallel").
# ----------------------------------------------------------------------------
def _film_kernel(x_ref, aw_ref, ab_ref, w_ref, b_ref, out_ref):
    # RevIN-style normalization (per-row mean / biased std over the time axis).
    x = x_ref[...]                                   # (tm, S), time on lanes
    mean = jnp.mean(x, axis=1, keepdims=True)        # (tm, 1)
    xc = x - mean
    var = jnp.mean(xc * xc, axis=1, keepdims=True)   # unbiased=False
    std = jnp.sqrt(var + 1e-5)
    aw = aw_ref[...]                                 # (tm, 1) per-channel affine
    ab = ab_ref[...]
    xn = (xc / std) * aw + ab                        # (tm, S)

    # Folded FiLM body: HiPPO scan + rfft + spectral mix + irfft@t_sel +
    # Legendre reconstruction + 3->1 mlp mix == one constant (S, pred) matrix.
    z = jnp.dot(xn, w_ref[...], preferred_element_type=jnp.float32)   # (tm, pred)
    z = z + b_ref[0]                                 # mlp bias (scalar from SMEM)

    # De-normalization (inverse RevIN).
    z = (z - ab) / (aw + 1e-10)
    out_ref[...] = z * std + mean


def film_forecast(x_enc, params):
    B, S, E = x_enc.shape
    pred = params['pred_len']
    M = B * E
    W = params['W']                                  # (S, pred) folded weights
    bias = params['b']                               # (1,)

    # Layout plumbing (tiny): time on the lane axis, (batch*channel) on sublanes.
    x_ms = jnp.transpose(x_enc, (0, 2, 1)).reshape(M, S)
    aw = jnp.tile(params['affine_weight'].reshape(1, E), (B, 1)).reshape(M, 1)
    ab = jnp.tile(params['affine_bias'].reshape(1, E), (B, 1)).reshape(M, 1)

    # Tile the row axis so large batches pipeline / shard across cores; at toy
    # sizes (M=16) this is a single grid step with full-array blocks.
    tm = M if (M % 8 != 0) else min(M, 256)
    grid_m = pl.cdiv(M, tm)

    out = pl.pallas_call(
        _film_kernel,
        out_shape=jax.ShapeDtypeStruct((M, pred), jnp.float32),
        grid=(grid_m,),
        in_specs=[
            pl.BlockSpec((tm, S), lambda i: (i, 0)),          # x rows
            pl.BlockSpec((tm, 1), lambda i: (i, 0)),          # affine weight rows
            pl.BlockSpec((tm, 1), lambda i: (i, 0)),          # affine bias rows
            pl.BlockSpec((S, pred), lambda i: (0, 0)),        # folded W (resident)
            pl.BlockSpec(memory_space=pltpu.MemorySpace.SMEM),  # mlp bias (1,)
        ],
        out_specs=pl.BlockSpec((tm, pred), lambda i: (i, 0)),
        compiler_params=pltpu.CompilerParams(
            dimension_semantics=("parallel",)),
    )(x_ms, aw, ab, W, bias)

    x_dec = out.reshape(B, E, pred).transpose(0, 2, 1)        # (B, pred, E)
    return x_dec[:, -pred:, :]


# ----------------------------------------------------------------------------
# Parameter construction + host-side folding of the constant per-branch chain.
# ----------------------------------------------------------------------------
def build_film_params(seq_len, pred_len, enc_in, key):
    window_size = [256]
    multiscale = [1, 2, 4]
    modes = min(32, min(pred_len, seq_len) // 2)
    S = seq_len
    nb = len(window_size) * len(multiscale)

    keys = jax.random.split(key, 2 * nb + 2)
    Wb_list = []
    ki = 0
    for n in window_size:
        for mi in multiscale:
            N = n
            dt = 1.0 / pred_len / mi
            A, Bm = transition(N)
            Ad, Bd = cont2discrete_bilinear(A, Bm, dt)
            Bd = Bd.squeeze(-1)                                  # (N,)

            x_in_len = mi * pred_len
            L = min(x_in_len, seq_len)
            t_sel = (pred_len - 1) if seq_len >= pred_len else (L - 1)
            # Retained modes must exclude the Nyquist bin for the c_k=2 weights.
            assert modes - 1 < L / 2.0

            # SSM convolution kernel: K[d] = B @ (A^T)^d  (window of L steps).
            K = np.zeros((L, N), dtype=np.float64)
            K[0] = Bd
            for d in range(1, L):
                K[d] = K[d - 1] @ Ad.T

            # Phi[k, s, n] = sum_{t>=s} exp(-2i*pi*k*t/L) * K[t-s, n]
            ks = np.arange(modes)
            ts = np.arange(L)
            Wdft = np.exp(-2j * np.pi * np.outer(ks, ts) / L)     # (modes, L)
            Ktoe = np.zeros((L, L, N), dtype=np.float64)
            for s in range(L):
                Ktoe[s:, s, :] = K[: L - s]
            Phi = np.einsum('kt,tsn->ksn', Wdft, Ktoe)            # complex (modes, L, N)

            # irfft contribution of mode k at time t_sel (out_ft zero elsewhere).
            ck = np.where(ks == 0, 1.0, 2.0)
            ang = 2.0 * np.pi * ks * t_sel / L
            a_k = (ck * np.cos(ang) / L)[:, None, None]
            b_k = (-ck * np.sin(ang) / L)[:, None, None]

            P = a_k * Phi.real + b_k * Phi.imag                   # (modes, L, N)
            Q = b_k * Phi.real - a_k * Phi.imag
            PQ = np.concatenate(
                [np.transpose(P, (1, 0, 2)).reshape(L, modes * N),
                 np.transpose(Q, (1, 0, 2)).reshape(L, modes * N)], axis=1)

            # Legendre reconstruction matrix: eval_matrix[-pred:, :].T  -> (N, pred)
            vals = np.arange(0.0, 1.0, dt)
            eval_mat = eval_legendre_matrix(N, 1.0 - 2.0 * vals)
            evalT = eval_mat[-pred_len:, :].T                     # (N, pred)

            # SpectralConv1d weights, same init as the reference (scale * U[0,1)).
            scale = 1.0 / (N * N)
            w_re = np.asarray(
                scale * jax.random.uniform(keys[ki], (N, N, modes), dtype=jnp.float32),
                dtype=np.float64)
            w_im = np.asarray(
                scale * jax.random.uniform(keys[ki + 1], (N, N, modes), dtype=jnp.float32),
                dtype=np.float64)
            ki += 2
            wr = np.transpose(w_re, (2, 0, 1)).reshape(modes * N, N)   # [k*N+n, o]
            wi = np.transpose(w_im, (2, 0, 1)).reshape(modes * N, N)
            wcat = np.concatenate([wr, wi], axis=0)                    # (2*modes*N, N)

            # Fold the whole constant chain for this branch: (L, pred), then
            # zero-pad on the left so it applies to the last-L slice of x_enc.
            Wb = PQ @ wcat @ evalT                                # (L, pred), float64
            Wb_pad = np.zeros((S, pred_len), dtype=np.float64)
            Wb_pad[S - L:, :] = Wb
            Wb_list.append(Wb_pad)

    bound = 1.0 / np.sqrt(nb)
    mlp_w = jax.random.uniform(keys[ki], (nb,), minval=-bound, maxval=bound,
                               dtype=jnp.float32)
    mlp_b = jax.random.uniform(keys[ki + 1], (1,), minval=-bound, maxval=bound,
                               dtype=jnp.float32)

    # Fold the Linear(3, 1) mix across branches into a single (S, pred) matrix.
    mlp_w_np = np.asarray(mlp_w, dtype=np.float64)
    W = np.zeros((S, pred_len), dtype=np.float64)
    for bidx in range(nb):
        W += mlp_w_np[bidx] * Wb_list[bidx]

    return dict(
        pred_len=pred_len,
        affine_weight=jnp.ones((enc_in,), jnp.float32),
        affine_bias=jnp.zeros((enc_in,), jnp.float32),
        W=jnp.asarray(W, dtype=jnp.float32),                      # (S, pred)
        b=mlp_b,                                                  # (1,)
    )


# ----------------------------------------------------------------------------
# Pure-JAX reference of the fused kernel (same folded math) for a sanity check.
# ----------------------------------------------------------------------------
def _reference_forecast(x_enc, params):
    B, S, E = x_enc.shape
    pred = params['pred_len']
    mean = jnp.mean(x_enc, axis=1, keepdims=True)
    xc = x_enc - mean
    std = jnp.sqrt(jnp.mean(xc * xc, axis=1, keepdims=True) + 1e-5)
    aw = params['affine_weight'].reshape(1, 1, E)
    ab = params['affine_bias'].reshape(1, 1, E)
    xn = (xc / std) * aw + ab                                     # (B, S, E)
    z = jnp.einsum('bse,sp->bpe', xn, params['W']) + params['b'][0]
    z = (z - ab) / (aw + 1e-10)
    z = z * std + mean
    return z[:, -pred:, :]


if __name__ == "__main__":
    B, seq_len, label_len, pred_len, enc_in = 2, 32, 16, 8, 8

    key = jax.random.PRNGKey(0)
    kx, kp = jax.random.split(key)
    x_enc = jax.random.normal(kx, (B, seq_len, enc_in), dtype=jnp.float32)
    # x_mark_enc / x_dec / x_mark_dec are unused by the forecast path.

    params = build_film_params(seq_len, pred_len, enc_in, kp)
    out = jax.block_until_ready(film_forecast(x_enc, params))
    assert out.shape == (B, pred_len, enc_in)

    ref = jax.block_until_ready(_reference_forecast(x_enc, params))
    np.testing.assert_allclose(np.asarray(out), np.asarray(ref), rtol=1e-4, atol=1e-4)

    print("KERNEL_OK")
</pallas_src>

<mosaic_0001>
module attributes {stable_mosaic.version = 11 : i64} {
  func.func @_film_kernel(%arg0: i32, %arg1: memref<16x32xf32, #tpu.memory_space<vmem>>, %arg2: memref<16x1xf32, #tpu.memory_space<vmem>>, %arg3: memref<16x1xf32, #tpu.memory_space<vmem>>, %arg4: memref<32x8xf32, #tpu.memory_space<vmem>>, %arg5: memref<1xf32, #tpu.memory_space<smem>>, %arg6: memref<16x8xf32, #tpu.memory_space<vmem>>) attributes {dimension_semantics = [#tpu.dimension_semantics<parallel>], iteration_bounds = array<i64: 1>, scalar_prefetch = 0 : i64, scratch_operands = 0 : i64, tpu.core_type = #tpu.core_type<tc>, window_params = [{transform_indices = @transform_0, window_bounds = array<i64: 16, 32>}, {transform_indices = @transform_1, window_bounds = array<i64: 16, 1>}, {transform_indices = @transform_2, window_bounds = array<i64: 16, 1>}, {pipeline_mode = #tpu.pipeline_mode<synchronous>, transform_indices = @transform_3, window_bounds = array<i64: 32, 8>}, {transform_indices = @transform_4, window_bounds = array<i64: 1>}, {transform_indices = @transform_5, window_bounds = array<i64: 16, 8>}]} {
    %c0 = arith.constant 0 : index
    %c0_0 = arith.constant 0 : index
    %0 = vector.load %arg1[%c0, %c0_0] : memref<16x32xf32, #tpu.memory_space<vmem>>, vector<16x32xf32>
    %cst = arith.constant dense<0.000000e+00> : vector<16xf32>
    %1 = vector.multi_reduction <add>, %0, %cst [1] : vector<16x32xf32> to vector<16xf32>
    %2 = vector.shape_cast %1 : vector<16xf32> to vector<16x1xf32>
    %cst_1 = arith.constant 3.200000e+01 : f32
    %3 = vector.broadcast %cst_1 : f32 to vector<16x1xf32>
    %4 = arith.divf %2, %3 : vector<16x1xf32>
    %5 = vector.broadcast %4 : vector<16x1xf32> to vector<16x32xf32>
    %6 = arith.subf %0, %5 : vector<16x32xf32>
    %7 = arith.mulf %6, %6 : vector<16x32xf32>
    %cst_2 = arith.constant dense<0.000000e+00> : vector<16xf32>
    %8 = vector.multi_reduction <add>, %7, %cst_2 [1] : vector<16x32xf32> to vector<16xf32>
    %9 = vector.shape_cast %8 : vector<16xf32> to vector<16x1xf32>
    %cst_3 = arith.constant 3.200000e+01 : f32
    %10 = vector.broadcast %cst_3 : f32 to vector<16x1xf32>
    %11 = arith.divf %9, %10 : vector<16x1xf32>
    %cst_4 = arith.constant 9.99999974E-6 : f32
    %12 = vector.broadcast %cst_4 : f32 to vector<16x1xf32>
    %13 = arith.addf %11, %12 : vector<16x1xf32>
    %14 = math.sqrt %13 : vector<16x1xf32>
    %c0_5 = arith.constant 0 : index
    %c0_6 = arith.constant 0 : index
    %15 = vector.load %arg2[%c0_5, %c0_6] : memref<16x1xf32, #tpu.memory_space<vmem>>, vector<16x1xf32>
    %c0_7 = arith.constant 0 : index
    %c0_8 = arith.constant 0 : index
    %16 = vector.load %arg3[%c0_7, %c0_8] : memref<16x1xf32, #tpu.memory_space<vmem>>, vector<16x1xf32>
    %17 = vector.broadcast %14 : vector<16x1xf32> to vector<16x32xf32>
    %18 = arith.divf %6, %17 : vector<16x32xf32>
    %19 = vector.broadcast %15 : vector<16x1xf32> to vector<16x32xf32>
    %20 = arith.mulf %18, %19 : vector<16x32xf32>
    %21 = vector.broadcast %16 : vector<16x1xf32> to vector<16x32xf32>
    %22 = arith.addf %20, %21 : vector<16x32xf32>
    %c0_9 = arith.constant 0 : index
    %c0_10 = arith.constant 0 : index
    %23 = vector.load %arg4[%c0_9, %c0_10] : memref<32x8xf32, #tpu.memory_space<vmem>>, vector<32x8xf32>
    %cst_11 = arith.constant dense<0.000000e+00> : vector<16x8xf32>
    %24 = tpu.matmul %22, %23, %cst_11 {dimension_numbers = #tpu.dot_dimension_numbers<[1], [0], [0], [1], [0, 0, 1, 1], [], []>} : vector<16x32xf32>, vector<32x8xf32>, vector<16x8xf32> -> vector<16x8xf32>
    %c0_12 = arith.constant 0 : index
    %25 = memref.load %arg5[%c0_12] : memref<1xf32, #tpu.memory_space<smem>>
    %26 = vector.broadcast %25 : f32 to vector<16x8xf32>
    %27 = arith.addf %24, %26 : vector<16x8xf32>
    %28 = vector.broadcast %16 : vector<16x1xf32> to vector<16x8xf32>
    %29 = arith.subf %27, %28 : vector<16x8xf32>
    %cst_13 = arith.constant 1.000000e-10 : f32
    %30 = vector.broadcast %cst_13 : f32 to vector<16x1xf32>
    %31 = arith.addf %15, %30 : vector<16x1xf32>
    %32 = vector.broadcast %31 : vector<16x1xf32> to vector<16x8xf32>
    %33 = arith.divf %29, %32 : vector<16x8xf32>
    %34 = vector.broadcast %14 : vector<16x1xf32> to vector<16x8xf32>
    %35 = arith.mulf %33, %34 : vector<16x8xf32>
    %36 = vector.broadcast %4 : vector<16x1xf32> to vector<16x8xf32>
    %37 = arith.addf %35, %36 : vector<16x8xf32>
    %c0_14 = arith.constant 0 : index
    %c0_15 = arith.constant 0 : index
    %38 = vector.load %arg6[%c0_14, %c0_15] : memref<16x8xf32, #tpu.memory_space<vmem>>, vector<16x8xf32>
    tpu.vector_store %arg6[%c0_14, %c0_15], %37 {strides = array<i32>} : memref<16x8xf32, #tpu.memory_space<vmem>>, vector<16x8xf32>,
    return
  }
  func.func @transform_0(%arg0: i32) -> (i32, i32) {
    %c0_i32 = arith.constant 0 : i32
    %c0_i32_0 = arith.constant 0 : i32
    return %arg0, %c0_i32 : i32, i32
  }
  func.func @transform_1(%arg0: i32) -> (i32, i32) {
    %c0_i32 = arith.constant 0 : i32
    %c0_i32_0 = arith.constant 0 : i32
    return %arg0, %c0_i32 : i32, i32
  }
  func.func @transform_2(%arg0: i32) -> (i32, i32) {
    %c0_i32 = arith.constant 0 : i32
    %c0_i32_0 = arith.constant 0 : i32
    return %arg0, %c0_i32 : i32, i32
  }
  func.func @transform_3(%arg0: i32) -> (i32, i32) {
    %c0_i32 = arith.constant 0 : i32
    %c0_i32_0 = arith.constant 0 : i32
    %c0_i32_1 = arith.constant 0 : i32
    return %c0_i32, %c0_i32_0 : i32, i32
  }
  func.func @transform_4(%arg0: i32) -> i32 {
    %c0_i32 = arith.constant 0 : i32
    %c0_i32_0 = arith.constant 0 : i32
    return %c0_i32 : i32
  }
  func.func @transform_5(%arg0: i32) -> (i32, i32) {
    %c0_i32 = arith.constant 0 : i32
    %c0_i32_0 = arith.constant 0 : i32
    return %arg0, %c0_i32 : i32, i32
  }
}

</mosaic_0001>

<llo_original>
// kernel: tpu_custom_call.1
$region0: #{tpu_custom_call.1}
  #allocation0 [shape = 'u32[]', space=smem, size = 0x4, offset = 0x4, fixed_abs, tag = 'smem constant byte address 0x4 - core index']
  #allocation1 [shape = 'u32[144,128]{1,0:T(1,128)}', space=vmem, size = 0x12000, scoped, tag = 'internal scratch']
  #allocation2 [shape = 'f32[1]{0:T(128)S(6)}', space=smem, size = 0x200, scoped, tag = 'scoped memory for tpu_custom_call.1']
  %s0 = inlined_call_operand.vmem [shape: f32[16,32], index: 0, kind: input, shape index: {}]
  %s1 = inlined_call_operand.vmem [shape: f32[16,1], index: 1, kind: input, shape index: {}]
  %s2 = inlined_call_operand.vmem [shape: f32[16,1], index: 2, kind: input, shape index: {}]
  %s3 = inlined_call_operand.vmem [shape: f32[32,8], index: 3, kind: input, shape index: {}]
  %s4 = inlined_call_operand.<no memory space> [shape: f32[1], index: 4, kind: input, shape index: {}]
  %s5 = inlined_call_operand.vmem [shape: f32[16,8], index: 5, kind: output, shape index: {}]
  %s6 = sld [smem:[#allocation0]]
  $region30: #{tpu_custom_call.1} parent=0
    _
  %s8 = ssub.s32 1, %s6
  %s9 = scalar_select 0, %s8, %s6
  %10 = sst [smem:[#allocation2]] %s4
  // Predicated region
  $region2: #{tpu_custom_call.1} parent=0 // pred_check
    _
  $region3: #{tpu_custom_call.1} parent=0 // pred_check_branch
    %12 = sbr.rel (0) target = $region5
  $region4: #{tpu_custom_call.1} parent=0 // pred_region
    _
  $region5: #{tpu_custom_call.1} parent=0 // pred_fallthru
    _
  // Predicated region
  $region6: #{tpu_custom_call.1} parent=0 // pred_check
    _
  $region7: #{tpu_custom_call.1} parent=0 // pred_check_branch
    %14 = sbr.rel (0) target = $region9
  $region8: #{tpu_custom_call.1} parent=0 // pred_region
    _
  $region9: #{tpu_custom_call.1} parent=0 // pred_fallthru
    _
  // Predicated region
  $region10: #{tpu_custom_call.1} parent=0 // pred_check
    _
  $region11: #{tpu_custom_call.1} parent=0 // pred_check_branch
    %16 = sbr.rel (0) target = $region13
  $region12: #{tpu_custom_call.1} parent=0 // pred_region
    _
  $region13: #{tpu_custom_call.1} parent=0 // pred_fallthru
    _
  // Predicated region
  $region14: #{tpu_custom_call.1} parent=0 // pred_check
    _
  $region15: #{tpu_custom_call.1} parent=0 // pred_check_branch
    %18 = sbr.rel (0) target = $region17
  $region16: #{tpu_custom_call.1} parent=0 // pred_region
    _
  $region17: #{tpu_custom_call.1} parent=0 // pred_fallthru
    _
  // Predicated region
  $region18: #{tpu_custom_call.1} parent=0 // pred_check
    _
  $region19: #{tpu_custom_call.1} parent=0 // pred_check_branch
    %20 = sbr.rel (0) target = $region21
  $region20: #{tpu_custom_call.1} parent=0 // pred_region
    _
  $region21: #{tpu_custom_call.1} parent=0 // pred_fallthru
    _
  %v21 = vld [vmem:[%s0] sm:$0xff]
  %v22 = vld [vmem:[%s0 + $0x8] sm:$0xff]
  %vm23 = vcmask 261120
  %v24 = vsel %vm23, %v21, 0.0
  %25 = vadd.xlane.f32.xlu0 %v24
  %v26 = vpop.xlane.xlu0 %25
  %v27 = vsel %vm23, %v22, 0.0
  %28 = vadd.xlane.f32.xlu0 %v27
  %v29 = vpop.xlane.xlu0 %28
  %v30 = vrcp.pop 32.0
  %v31 = vmul.f32 %v26, %v30
  %v32 = vmul.f32 %v29, %v30
  %v33 = vsub.f32 %v21, %v31
  %v34 = vsub.f32 %v22, %v32
  %v35 = vmul.f32 %v33, %v33
  %v36 = vmul.f32 %v34, %v34
  %v37 = vsel %vm23, %v35, 0.0
  %38 = vadd.xlane.f32.xlu0 %v37
  %v39 = vpop.xlane.xlu0 %38
  %v40 = vsel %vm23, %v36, 0.0
  %41 = vadd.xlane.f32.xlu0 %v40
  %v42 = vpop.xlane.xlu0 %41
  %v43 = vmul.f32 %v39, %v30
  %v44 = vmul.f32 %v42, %v30
  %v45 = vadd.f32 %v43, 1e-05
  %v46 = vadd.f32 %v44, 1e-05
  %v47 = vrsqrt.pop %v45
  %v48 = vmul.f32 %v45, %v47
  %vm49 = vcmp.eq.f32.partialorder %v45, inf
  %v50 = vsel %vm49, %v45, %v48
  %vm51 = vcmp.eq.f32.partialorder %v45, 0.0
  %v52 = vand.u32 %v45, 2147483648
  %v53 = vsel %vm51, %v52, %v50
  %v54 = vrsqrt.pop %v46
  %v55 = vmul.f32 %v46, %v54
  %vm56 = vcmp.eq.f32.partialorder %v46, inf
  %v57 = vsel %vm56, %v46, %v55
  %vm58 = vcmp.eq.f32.partialorder %v46, 0.0
  %v59 = vand.u32 %v46, 2147483648
  %v60 = vsel %vm58, %v59, %v57
  %v61 = vld [vmem:[%s1] sm:$0xff]
  %v62 = vld [vmem:[%s1 + $0x8] sm:$0xff]
  %v63 = vld [vmem:[%s2] sm:$0xff]
  %v64 = vld [vmem:[%s2 + $0x8] sm:$0xff]
  %v65 = vrcp.pop %v53
  %v66 = vmul.f32 %v33, %v65
  %v67 = vrcp.pop %v60
  %v68 = vmul.f32 %v34, %v67
  %70 = vset.pattern.permute.xlu0 0
  %71 = vperm.xlu0 %70, %v61
  %v72 = vpop.permute.xlu0 %71
  %75 = vset.pattern.permute.xlu0 0
  %76 = vperm.xlu0 %75, %v62
  %v77 = vpop.permute.xlu0 %76
  %v79 = vmul.f32 %v66, %v72
  %v80 = vmul.f32 %v68, %v77
  %82 = vset.pattern.permute.xlu0 0
  %83 = vperm.xlu0 %82, %v63
  %v84 = vpop.permute.xlu0 %83
  %87 = vset.pattern.permute.xlu0 0
  %88 = vperm.xlu0 %87, %v64
  %v89 = vpop.permute.xlu0 %88
  %v91 = vadd.f32 %v79, %v84
  %v92 = vadd.f32 %v80, %v89
  %v93 = vld [vmem:[%s3] sm:$0xff]
  %v94 = vld [vmem:[%s3 + $0x8] sm:$0xff]
  %v95 = vld [vmem:[%s3 + $0x10] sm:$0xff]
  %v96 = vld [vmem:[%s3 + $0x18] sm:$0xff]
  %s97 = sld [smem:[#allocation2]]
  %v98 = vstv %s97
  %v100 = vsel %vm23, %v91, 0
  %v103 = vsel %vm23, %v92, 0
  %105 = vmatprep.subr.mxu0 0.0
  %106 = vmatpush1.msra.mxu0 %v93
  %107 = vmatprep.subr.mxu0 0.0
  %108 = vmatpush1.msra.mxu0 %v94
  %109 = vmatprep.subr.mxu0 0.0
  %110 = vmatpush1.msra.mxu0 %v95
  %111 = vmatprep.subr.mxu0 0.0
  %112 = vmatpush1.msra.mxu0 %v96
  %113 = vmatprep.subr.mxu0 0.0
  %114 = vmatpush1.msra.mxu0 0.0
  %115 = vmatprep.subr.mxu0 0.0
  %116 = vmatpush1.msra.mxu0 0.0
  %117 = vmatprep.subr.mxu0 0.0
  %118 = vmatpush1.msra.mxu0 0.0
  %119 = vmatprep.subr.mxu0 0.0
  %120 = vmatpush1.msra.mxu0 0.0
  %121 = vmatprep.subr.mxu0 0.0
  %122 = vmatpush1.msra.mxu0 0.0
  %123 = vmatprep.subr.mxu0 0.0
  %124 = vmatpush1.msra.mxu0 0.0
  %125 = vmatprep.subr.mxu0 0.0
  %126 = vmatpush1.msra.mxu0 0.0
  %127 = vmatprep.subr.mxu0 0.0
  %128 = vmatpush1.msra.mxu0 0.0
  %129 = vmatprep.subr.mxu0 0.0
  %130 = vmatpush1.msra.mxu0 0.0
  %131 = vmatprep.subr.mxu0 0.0
  %132 = vmatpush1.msra.mxu0 0.0
  %133 = vmatprep.subr.mxu0 0.0
  %134 = vmatpush1.msra.mxu0 0.0
  %135 = vmatprep.subr.mxu0 0.0
  %136 = vmatpush1.msra.mxu0 0.0
  %137 = vmatprep.subr.mxu0 0.0
  %138 = vmatpush1.msra.mxu0 0.0
  %139 = vmatprep.subr.mxu0 0.0
  %140 = vmatpush1.msra.mxu0 0.0
  %141 = vmatprep.subr.mxu0 0.0
  %142 = vmatpush1.msra.mxu0 0.0
  %143 = vmatprep.subr.mxu0 0.0
  %144 = vmatpush1.msra.mxu0 0.0
  %145 = vmatprep.subr.mxu0 0.0
  %146 = vmatpush1.msra.mxu0 0.0
  %147 = vmatprep.subr.mxu0 0.0
  %148 = vmatpush1.msra.mxu0 0.0
  %149 = vmatprep.subr.mxu0 0.0
  %150 = vmatpush1.msra.mxu0 0.0
  %151 = vmatprep.subr.mxu0 0.0
  %152 = vmatpush1.msra.mxu0 0.0
  %153 = vmatprep.subr.mxu0 0.0
  %154 = vmatpush1.msra.mxu0 0.0
  %155 = vmatprep.subr.mxu0 0.0
  %156 = vmatpush1.msra.mxu0 0.0
  %157 = vmatprep.subr.mxu0 0.0
  %158 = vmatpush1.msra.mxu0 0.0
  %159 = vmatprep.subr.mxu0 0.0
  %160 = vmatpush1.msra.mxu0 0.0
  %161 = vmatprep.subr.mxu0 0.0
  %162 = vmatpush1.msra.mxu0 0.0
  %163 = vmatprep.subr.mxu0 0.0
  %164 = vmatpush1.msra.mxu0 0.0
  %165 = vmatprep.subr.mxu0 0.0
  %166 = vmatpush1.msra.mxu0 0.0
  %167 = vmatprep.subr.mxu0 0.0
  %168 = vmatpush1.msra.mxu0 0.0
  %169 = vmatprep.mubr.f32.mxu0 0.0
  %170 = vmatmul.mubr.f32.gmra.mrb[0].mxu0 %v100
  %v171 = vpop.f32.mrb[0].mxu0
  %v172 = vadd.f32 %v98, %v171
  %v173 = vpop.f32.mrb[0].mxu0
  %174 = vmatprep.mubr.f32.mxu0 0.0
  %175 = vmatmul.mubr.f32.gmra.mrb[0].mxu0 %v103
  %v176 = vpop.f32.mrb[0].mxu0
  %v177 = vadd.f32 %v98, %v176
  %v178 = vpop.f32.mrb[0].mxu0
  %179 = vdwg.mxu0
  %v180 = vsub.f32 %v172, %v84
  %v181 = vsub.f32 %v177, %v89
  %v182 = vadd.f32 %v61, 1e-10
  %v183 = vadd.f32 %v62, 1e-10
  %185 = vset.pattern.permute.xlu0 0
  %186 = vperm.xlu0 %185, %v182
  %v187 = vpop.permute.xlu0 %186
  %190 = vset.pattern.permute.xlu0 0
  %191 = vperm.xlu0 %190, %v183
  %v192 = vpop.permute.xlu0 %191
  %v194 = vrcp.pop %v187
  %v195 = vmul.f32 %v180, %v194
  %v196 = vrcp.pop %v192
  %v197 = vmul.f32 %v181, %v196
  %v198 = vmul.f32 %v195, %v53
  %v199 = vmul.f32 %v197, %v60
  %v200 = vadd.f32 %v198, %v31
  %v201 = vadd.f32 %v199, %v32
  %vm202 = vcmask 64512
  %203 = vst.msk [vmem:[%s5] sm:$0xff] %vm202, %v200
  %204 = vst.msk [vmem:[%s5 + $0x8] sm:$0xff] %vm202, %v201
  // Predicated region
  $region22: #{tpu_custom_call.1} parent=0 // pred_check
    _
  $region23: #{tpu_custom_call.1} parent=0 // pred_check_branch
    %206 = sbr.rel (0) target = $region25
  $region24: #{tpu_custom_call.1} parent=0 // pred_region
    _
  $region25: #{tpu_custom_call.1} parent=0 // pred_fallthru
    _
  // Predicated region
  $region26: #{tpu_custom_call.1} parent=0 // pred_check
    _
  $region27: #{tpu_custom_call.1} parent=0 // pred_check_branch
    %208 = sbr.rel (0) target = $region29
  $region28: #{tpu_custom_call.1} parent=0 // pred_region
    _
  $region29: #{tpu_custom_call.1} parent=0 // pred_fallthru
    _

</llo_original>
